<compile_context>
chip_gen: v6e
topology: v6e:2x2x1
jax: 0.10.0
libtpu: 0.0.40
codegen_flags: <defaults>
</compile_context>

<pallas_src>
import jax
import jax.numpy as jnp
from jax.experimental import pallas as pl
from jax.experimental.pallas import tpu as pltpu


def beale_kernel(p_ref, val_ref, grad_ref):
    # p_ref:    SMEM f32[2]  -> (x, y)
    # val_ref:  SMEM f32[1]  -> Beale(x, y)
    # grad_ref: SMEM f32[2]  -> (dBeale/dx, dBeale/dy)
    x = p_ref[0]
    y = p_ref[1]
    xy = x * y          # reused across all three terms
    y2 = y * y
    y3 = y2 * y
    t1 = 1.5 - x + xy
    t2 = 2.25 - x + xy * y
    t3 = 2.625 - x + xy * y2
    val_ref[0] = t1 * t1 + t2 * t2 + t3 * t3
    # Analytic Beale gradient (fused into the same dispatch; residual for VJP).
    grad_ref[0] = 2.0 * (t1 * (y - 1.0) + t2 * (y2 - 1.0) + t3 * (y3 - 1.0))
    grad_ref[1] = 2.0 * x * (t1 + 2.0 * t2 * y + 3.0 * t3 * y2)


def _beale_value_and_grad_call(param_f32):
    val, grad = pl.pallas_call(
        beale_kernel,
        out_shape=(
            jax.ShapeDtypeStruct((1,), jnp.float32),
            jax.ShapeDtypeStruct((2,), jnp.float32),
        ),
        in_specs=[pl.BlockSpec(memory_space=pltpu.SMEM)],
        out_specs=(
            pl.BlockSpec(memory_space=pltpu.SMEM),
            pl.BlockSpec(memory_space=pltpu.SMEM),
        ),
        # Tiny scalar kernel: tell XLA it's essentially free so it doesn't
        # schedule conservatively around an "opaque" custom call.
        cost_estimate=pl.CostEstimate(flops=35, transcendentals=0, bytes_accessed=20),
    )(param_f32)
    # reshape (1,) -> () in-graph (no slice/gather HLO after the custom call).
    return val.reshape(()), grad


@jax.custom_vjp
def _beale(param_f32):
    val, _ = _beale_value_and_grad_call(param_f32)
    return val


def _beale_fwd(param_f32):
    val, grad = _beale_value_and_grad_call(param_f32)
    return val, grad  # gradient computed inside the same kernel dispatch


def _beale_bwd(grad, g):
    return (g * grad,)


_beale.defvjp(_beale_fwd, _beale_bwd)


def beale_forward(param, inp):
    # `inp` is ignored, mirroring the PyTorch forward semantics; it is NOT
    # passed to the pallas_call (avoids a useless HBM->VMEM DMA).
    del inp
    # Cast only if needed (avoids an unfused HLO convert feeding the custom call).
    param_f32 = param if param.dtype == jnp.float32 else param.astype(jnp.float32)
    return _beale(param_f32)


if __name__ == "__main__":
    key = jax.random.PRNGKey(0)
    kp, ki = jax.random.split(key)

    # Deterministic "parameter" init (shape (2,), standard normal like torch.randn).
    param = jax.random.normal(kp, (2,), dtype=jnp.float32)
    # Example input (unused by the forward pass, but part of the call signature).
    inp = jax.random.normal(ki, (2, 4, 16, 16), dtype=jnp.float32)

    result = jax.block_until_ready(beale_forward(param, inp))

    # Pure-JAX reference check (forward).
    def beale_ref(p):
        x, y = p[0], p[1]
        return ((1.5 - x + x * y) ** 2
                + (2.25 - x + x * y**2) ** 2
                + (2.625 - x + x * y**3) ** 2)

    ref = beale_ref(param)
    assert jnp.allclose(result, ref, rtol=1e-5, atol=1e-5), (result, ref)

    # Gradient check (fused in-kernel analytic gradient vs. autodiff of ref).
    g_kernel = jax.block_until_ready(jax.grad(lambda p: beale_forward(p, inp))(param))
    g_ref = jax.grad(beale_ref)(param)
    assert jnp.allclose(g_kernel, g_ref, rtol=1e-4, atol=1e-4), (g_kernel, g_ref)

    print("KERNEL_OK")
</pallas_src>

<mosaic_0001>
module attributes {stable_mosaic.version = 11 : i64} {
  func.func @beale_kernel(%arg0: memref<2xf32, #tpu.memory_space<smem>>, %arg1: memref<1xf32, #tpu.memory_space<smem>>, %arg2: memref<2xf32, #tpu.memory_space<smem>>) attributes {dimension_semantics = [], scalar_prefetch = 0 : i64, scratch_operands = 0 : i64, tpu.core_type = #tpu.core_type<tc>} {
    %c0 = arith.constant 0 : index
    %0 = memref.load %arg0[%c0] : memref<2xf32, #tpu.memory_space<smem>>
    %c1 = arith.constant 1 : index
    %1 = memref.load %arg0[%c1] : memref<2xf32, #tpu.memory_space<smem>>
    %2 = arith.mulf %0, %1 : f32
    %3 = arith.mulf %1, %1 : f32
    %4 = arith.mulf %3, %1 : f32
    %cst = arith.constant 1.500000e+00 : f32
    %5 = arith.subf %cst, %0 : f32
    %6 = arith.addf %5, %2 : f32
    %cst_0 = arith.constant 2.250000e+00 : f32
    %7 = arith.subf %cst_0, %0 : f32
    %8 = arith.mulf %2, %1 : f32
    %9 = arith.addf %7, %8 : f32
    %cst_1 = arith.constant 2.625000e+00 : f32
    %10 = arith.subf %cst_1, %0 : f32
    %11 = arith.mulf %2, %3 : f32
    %12 = arith.addf %10, %11 : f32
    %13 = arith.mulf %6, %6 : f32
    %14 = arith.mulf %9, %9 : f32
    %15 = arith.addf %13, %14 : f32
    %16 = arith.mulf %12, %12 : f32
    %17 = arith.addf %15, %16 : f32
    %c0_2 = arith.constant 0 : index
    %18 = memref.load %arg1[%c0_2] : memref<1xf32, #tpu.memory_space<smem>>
    memref.store %17, %arg1[%c0_2] : memref<1xf32, #tpu.memory_space<smem>>
    %cst_3 = arith.constant 1.000000e+00 : f32
    %19 = arith.subf %1, %cst_3 : f32
    %20 = arith.mulf %6, %19 : f32
    %cst_4 = arith.constant 1.000000e+00 : f32
    %21 = arith.subf %3, %cst_4 : f32
    %22 = arith.mulf %9, %21 : f32
    %23 = arith.addf %20, %22 : f32
    %cst_5 = arith.constant 1.000000e+00 : f32
    %24 = arith.subf %4, %cst_5 : f32
    %25 = arith.mulf %12, %24 : f32
    %26 = arith.addf %23, %25 : f32
    %cst_6 = arith.constant 2.000000e+00 : f32
    %27 = arith.mulf %cst_6, %26 : f32
    %c0_7 = arith.constant 0 : index
    %28 = memref.load %arg2[%c0_7] : memref<2xf32, #tpu.memory_space<smem>>
    memref.store %27, %arg2[%c0_7] : memref<2xf32, #tpu.memory_space<smem>>
    %cst_8 = arith.constant 2.000000e+00 : f32
    %29 = arith.mulf %cst_8, %0 : f32
    %cst_9 = arith.constant 2.000000e+00 : f32
    %30 = arith.mulf %cst_9, %9 : f32
    %31 = arith.mulf %30, %1 : f32
    %32 = arith.addf %6, %31 : f32
    %cst_10 = arith.constant 3.000000e+00 : f32
    %33 = arith.mulf %cst_10, %12 : f32
    %34 = arith.mulf %33, %3 : f32
    %35 = arith.addf %32, %34 : f32
    %36 = arith.mulf %29, %35 : f32
    %c1_11 = arith.constant 1 : index
    %37 = memref.load %arg2[%c1_11] : memref<2xf32, #tpu.memory_space<smem>>
    memref.store %36, %arg2[%c1_11] : memref<2xf32, #tpu.memory_space<smem>>
    return
  }
}

</mosaic_0001>

<llo_original>
// kernel: tpu_custom_call.1
$region0: #{tpu_custom_call.1}
  #allocation0 [shape = 'u32[]', space=smem, size = 0x4, offset = 0x4, fixed_abs, tag = 'smem constant byte address 0x4 - core index']
  #allocation1 [shape = 'u32[144,128]{1,0:T(1,128)}', space=vmem, size = 0x12000, scoped, tag = 'internal scratch']
  %s0 = inlined_call_operand.hbm [shape: f32[2], index: 0, kind: input, shape index: {}]
  %s1 = inlined_call_operand.hbm [shape: f32[1], index: 1, kind: output, shape index: {0}]
  %s2 = inlined_call_operand.hbm [shape: f32[2], index: 2, kind: output, shape index: {1}]
  %3 = xla_tuple %s1, %s2
  %s4 = sld [smem:[#allocation0]]
  $region26: #{tpu_custom_call.1} parent=0
    _
  %s6 = ssub.s32 1, %s4
  %s7 = scalar_select 0, %s6, %s4
  $region1: #{tpu_custom_call.1} parent=0
    #allocation2 [shape = 'u8[512]{0}', space=smem, size = 0x200, scoped, tag = 'input window, operand 0, single buffered']
    #allocation3 [shape = 's32[1]{0}', space=sflag, size = 0x4, scoped, tag = 'scoped memory for tpu_custom_call.1']
    #allocation4 [shape = 's32[1]{0}', space=sflag, size = 0x4, scoped, tag = 'scoped memory for tpu_custom_call.1']
    #allocation5 [shape = 'u8[512]{0}', space=smem, size = 0x200, scoped, tag = 'output window, operand 0, single buffered']
    #allocation6 [shape = 'u8[512]{0}', space=smem, size = 0x200, scoped, tag = 'output window, operand 1, single buffered']
    #allocation7 [shape = 's32[1]{0}', space=sflag, size = 0x4, scoped, tag = 'scoped memory for tpu_custom_call.1']
    %8 = vsyncpa [#allocation3], 0
    %9 = vsyncpa [#allocation4], 0
    %10 = vsyncpa [#allocation7], 0
    // Predicated region
    $region2: #{tpu_custom_call.1} parent=1 // pred_check
      _
    $region3: #{tpu_custom_call.1} parent=1 // pred_check_branch
      %12 = sbr.rel (0) target = $region5
    $region4: #{tpu_custom_call.1} parent=1 // pred_region
      %s14 = ssub.s32 16, 16
      %15 = vsyncadd [#allocation3], %s14
      %18 = dma.hbm_to_smem %s0, 16, [#allocation2], [#allocation3]
    $region5: #{tpu_custom_call.1} parent=1 // pred_fallthru
      _
    // Predicated region
    $region6: #{tpu_custom_call.1} parent=1 // pred_check
      _
    $region7: #{tpu_custom_call.1} parent=1 // pred_check_branch
      %20 = sbr.rel (0) target = $region9
    $region8: #{tpu_custom_call.1} parent=1 // pred_region
      %21 = dma.done [#allocation3], 16
    $region9: #{tpu_custom_call.1} parent=1 // pred_fallthru
      _
    %22 = sfence
    %s23 = sld [smem:[#allocation2]]
    %s24 = sld [smem:[#allocation2 + $0x1]]
    %s25 = smul.f32 %s23, %s24
    %s26 = smul.f32 %s24, %s24
    %s27 = smul.f32 %s26, %s24
    %s28 = ssub.f32 1.5, %s23
    %s29 = sadd.f32 %s28, %s25
    %s30 = ssub.f32 2.25, %s23
    %s31 = smul.f32 %s25, %s24
    %s32 = sadd.f32 %s30, %s31
    %s33 = ssub.f32 2.625, %s23
    %s34 = smul.f32 %s25, %s26
    %s35 = sadd.f32 %s33, %s34
    %s36 = smul.f32 %s29, %s29
    %s37 = smul.f32 %s32, %s32
    %s38 = sadd.f32 %s36, %s37
    %s39 = smul.f32 %s35, %s35
    %s40 = sadd.f32 %s38, %s39
    %s41 = scalar_lea.smem [#allocation5], 0
    %42 = sst [smem:[%s41]] %s40
    %s43 = ssub.f32 %s24, 1.0
    %s44 = smul.f32 %s29, %s43
    %s45 = ssub.f32 %s26, 1.0
    %s46 = smul.f32 %s32, %s45
    %s47 = sadd.f32 %s44, %s46
    %s48 = ssub.f32 %s27, 1.0
    %s49 = smul.f32 %s35, %s48
    %s50 = sadd.f32 %s47, %s49
    %s51 = smul.f32 %s50, 2.0
    %s52 = scalar_lea.smem [#allocation6], 0
    %53 = sst [smem:[%s52]] %s51
    %s54 = smul.f32 %s23, 2.0
    %s55 = smul.f32 %s32, 2.0
    %s56 = smul.f32 %s55, %s24
    %s57 = sadd.f32 %s29, %s56
    %s58 = smul.f32 %s35, 3.0
    %s59 = smul.f32 %s58, %s26
    %s60 = sadd.f32 %s57, %s59
    %s61 = smul.f32 %s54, %s60
    %s62 = scalar_lea.smem [#allocation6], 1
    %63 = sst [smem:[%s62]] %s61
    // Predicated region
    $region10: #{tpu_custom_call.1} parent=1 // pred_check
      _
    $region11: #{tpu_custom_call.1} parent=1 // pred_check_branch
      %65 = sbr.rel (0) target = $region13
    $region12: #{tpu_custom_call.1} parent=1 // pred_region
      %s67 = ssub.s32 16, 16
      %68 = vsyncadd [#allocation4], %s67
      %71 = dma.smem_to_hbm [#allocation5], 16, %s1, [#allocation4]
    $region13: #{tpu_custom_call.1} parent=1 // pred_fallthru
      _
    // Predicated region
    $region14: #{tpu_custom_call.1} parent=1 // pred_check
      _
    $region15: #{tpu_custom_call.1} parent=1 // pred_check_branch
      %73 = sbr.rel (0) target = $region17
    $region16: #{tpu_custom_call.1} parent=1 // pred_region
      %s75 = ssub.s32 16, 16
      %76 = vsyncadd [#allocation7], %s75
      %79 = dma.smem_to_hbm [#allocation6], 16, %s2, [#allocation7]
    $region17: #{tpu_custom_call.1} parent=1 // pred_fallthru
      _
    // Predicated region
    $region18: #{tpu_custom_call.1} parent=1 // pred_check
      _
    $region19: #{tpu_custom_call.1} parent=1 // pred_check_branch
      %81 = sbr.rel (0) target = $region21
    $region20: #{tpu_custom_call.1} parent=1 // pred_region
      %82 = dma.done [#allocation4], 16
    $region21: #{tpu_custom_call.1} parent=1 // pred_fallthru
      _
    // Predicated region
    $region22: #{tpu_custom_call.1} parent=1 // pred_check
      _
    $region23: #{tpu_custom_call.1} parent=1 // pred_check_branch
      %84 = sbr.rel (0) target = $region25
    $region24: #{tpu_custom_call.1} parent=1 // pred_region
      %85 = dma.done [#allocation7], 16
    $region25: #{tpu_custom_call.1} parent=1 // pred_fallthru
      _
    %86 = sfence
    %87 = vsyncpa [#allocation3], 1
    %88 = vsyncpa [#allocation4], 1
    %89 = vsyncpa [#allocation7], 1

</llo_original>
